<compile_context>
chip_gen: v7x
topology: tpu7x:2x2x1
jax: 0.10.0
libtpu: 0.0.40
codegen_flags: <defaults>
</compile_context>

<pallas_src>
import jax
import jax.numpy as jnp
from jax import lax
from jax.experimental import pallas as pl
from jax.experimental.pallas import tpu as pltpu


def _round_up(n, m):
    return ((n + m - 1) // m) * m


def nest_mlp_kernel(x_ref, w1_ref, b1_ref, w2_ref, b2_ref, w3_ref, b3_ref, o_ref):
    """Fused MLP. Input arrives in native (TILE_B, 20) layout; intermediates are
    computed in (feat, TILE_B) orientation (batch on the 128-lane axis)."""
    x = x_ref[...]                                                     # (TILE_B, 20)

    # h1^T = W1 @ x^T, expressed as a contraction over the feature dim of both
    # operands so no transpose of x is materialized.
    h1 = lax.dot_general(w1_ref[...], x, (((1,), (1,)), ((), ())),
                         preferred_element_type=jnp.float32) + b1_ref[...]
    h1 = jnp.maximum(h1, 0.0)                                          # (64, TILE_B)

    h2 = jnp.dot(w2_ref[...], h1, preferred_element_type=jnp.float32) + b2_ref[...]
    h2 = jnp.maximum(h2, 0.0)                                          # (32, TILE_B)

    y = jnp.dot(w3_ref[...], h2, preferred_element_type=jnp.float32) + b3_ref[...]  # (16, TILE_B)

    # Re-orient to the native (TILE_B, 16) output layout in-kernel (XLU
    # transpose; no extra HBM pass in the wrapper).
    o_ref[...] = y.T.astype(o_ref.dtype)


def nest_mlp(x, params, *, tile_b=4096):
    """x: (B, 20) float32, native layout. params: PyTorch-layout weights
    w{i}: (out, in), b{i}: (out, 1). Returns (B, 16)."""
    B, d_in = x.shape
    assert d_in == 20, d_in

    w1, b1 = params["w1"], params["b1"]   # (64, 20), (64, 1)
    w2, b2 = params["w2"], params["b2"]   # (32, 64), (32, 1)
    w3, b3 = params["w3"], params["b3"]   # (16, 32), (16, 1)
    d_out = w3.shape[0]

    # Batch tile: multiple of 8 (sublane granule). The lane (last) dims of the
    # x / y blocks are the full feature dims (20 / 16), as required when they
    # are not 128-multiples. No explicit batch padding: the last tile may be
    # ragged and Pallas masks its out-of-range rows on writeback.
    tile = min(tile_b, _round_up(B, 8))
    # Keep >= 4 tiles when the batch is big enough so the "parallel" batch axis
    # spans both v7x TensorCores and the DMA pipeline stays busy; never drop
    # below 512 rows/tile (per-grid-step overhead ~0.35us).
    if B >= 4 * 512:
        tile = min(tile, max(512, _round_up(-(-B // 4), 8)))
    grid = (pl.cdiv(B, tile),)

    # Weights/biases: constant index_map -> VMEM-resident across all tiles.
    resident = lambda a: pl.BlockSpec(a.shape, lambda i: (0, 0))

    flops = 2 * B * (20 * 64 + 64 * 32 + 32 * 16)
    param_bytes = sum(int(p.size) * p.dtype.itemsize for p in params.values())
    bytes_accessed = B * (d_in + d_out) * x.dtype.itemsize + param_bytes

    return pl.pallas_call(
        nest_mlp_kernel,
        out_shape=jax.ShapeDtypeStruct((B, d_out), x.dtype),
        grid=grid,
        in_specs=[
            pl.BlockSpec((tile, d_in), lambda i: (i, 0)),   # x batch tile, native layout
            resident(w1), resident(b1),
            resident(w2), resident(b2),
            resident(w3), resident(b3),
        ],
        out_specs=pl.BlockSpec((tile, d_out), lambda i: (i, 0)),
        compiler_params=pltpu.CompilerParams(
            # Batch tiles are independent -> shard across TensorCores on v7x
            # (measured no-op on single-TC v5e/v6e; harmless to keep).
            dimension_semantics=("parallel",),
            # ~13 MiB working set at tile=4096 (the narrow 20/16-lane I/O blocks
            # pad to 128 lanes in VMEM). 32 MiB raises v5e's 16 MiB default and
            # matches the v6e/v7x default scoped limit (64 MiB physical on v7x).
            vmem_limit_bytes=32 * 1024 * 1024,
        ),
        cost_estimate=pl.CostEstimate(
            flops=flops, transcendentals=0, bytes_accessed=bytes_accessed),
    )(x, w1, b1, w2, b2, w3, b3)


def init_params(key):
    """PyTorch nn.Linear default init (U[-1/sqrt(fan_in), 1/sqrt(fan_in)]).
    Stored in native PyTorch layout: W (out_features, in_features), b (out_features, 1)."""
    dims = [(20, 64), (64, 32), (32, 16)]
    params = {}
    keys = jax.random.split(key, 2 * len(dims))
    for idx, (fan_in, fan_out) in enumerate(dims):
        bound = 1.0 / (fan_in ** 0.5)
        w = jax.random.uniform(keys[2 * idx], (fan_out, fan_in),
                               minval=-bound, maxval=bound, dtype=jnp.float32)
        b = jax.random.uniform(keys[2 * idx + 1], (fan_out, 1),
                               minval=-bound, maxval=bound, dtype=jnp.float32)
        params[f"w{idx + 1}"] = w
        params[f"b{idx + 1}"] = b
    return params


def nest_mlp_ref(x, params):
    h = jnp.maximum(x @ params["w1"].T + params["b1"].T, 0.0)
    h = jnp.maximum(h @ params["w2"].T + params["b2"].T, 0.0)
    return h @ params["w3"].T + params["b3"].T


if __name__ == "__main__":
    key = jax.random.PRNGKey(0)
    k_param, k_x = jax.random.split(key)
    params = init_params(k_param)

    # (batch, tile_b): exercises (a) a single small tile and (b) multiple tiles
    # with a ragged last tile (300 = 2*128 + 44, masked on writeback).
    for batch, tile_b in [(8, 4096), (300, 128)]:
        x = jax.random.normal(jax.random.fold_in(k_x, batch), (batch, 20),
                              dtype=jnp.float32)
        out = jax.block_until_ready(nest_mlp(x, params, tile_b=tile_b))
        ref = nest_mlp_ref(x, params)
        assert out.shape == (batch, 16), out.shape
        assert jnp.allclose(out, ref, atol=1e-5, rtol=1e-5), \
            f"mismatch vs reference (batch={batch})"

    print("KERNEL_OK")
</pallas_src>

<mosaic_0001>
module attributes {stable_mosaic.version = 11 : i64} {
  func.func @nest_mlp_kernel(%arg0: i32, %arg1: memref<8x20xf32, #tpu.memory_space<vmem>>, %arg2: memref<64x20xf32, #tpu.memory_space<vmem>>, %arg3: memref<64x1xf32, #tpu.memory_space<vmem>>, %arg4: memref<32x64xf32, #tpu.memory_space<vmem>>, %arg5: memref<32x1xf32, #tpu.memory_space<vmem>>, %arg6: memref<16x32xf32, #tpu.memory_space<vmem>>, %arg7: memref<16x1xf32, #tpu.memory_space<vmem>>, %arg8: memref<8x16xf32, #tpu.memory_space<vmem>>) attributes {dimension_semantics = [#tpu.dimension_semantics<parallel>], iteration_bounds = array<i64: 1>, scalar_prefetch = 0 : i64, scratch_operands = 0 : i64, tpu.core_type = #tpu.core_type<tc>, window_params = [{transform_indices = @transform_0, window_bounds = array<i64: 8, 20>}, {pipeline_mode = #tpu.pipeline_mode<synchronous>, transform_indices = @transform_1, window_bounds = array<i64: 64, 20>}, {pipeline_mode = #tpu.pipeline_mode<synchronous>, transform_indices = @transform_2, window_bounds = array<i64: 64, 1>}, {pipeline_mode = #tpu.pipeline_mode<synchronous>, transform_indices = @transform_3, window_bounds = array<i64: 32, 64>}, {pipeline_mode = #tpu.pipeline_mode<synchronous>, transform_indices = @transform_4, window_bounds = array<i64: 32, 1>}, {pipeline_mode = #tpu.pipeline_mode<synchronous>, transform_indices = @transform_5, window_bounds = array<i64: 16, 32>}, {pipeline_mode = #tpu.pipeline_mode<synchronous>, transform_indices = @transform_6, window_bounds = array<i64: 16, 1>}, {transform_indices = @transform_7, window_bounds = array<i64: 8, 16>}]} {
    %c0 = arith.constant 0 : index
    %c0_0 = arith.constant 0 : index
    %0 = vector.load %arg1[%c0, %c0_0] : memref<8x20xf32, #tpu.memory_space<vmem>>, vector<8x20xf32>
    %c0_1 = arith.constant 0 : index
    %c0_2 = arith.constant 0 : index
    %1 = vector.load %arg2[%c0_1, %c0_2] : memref<64x20xf32, #tpu.memory_space<vmem>>, vector<64x20xf32>
    %cst = arith.constant dense<0.000000e+00> : vector<64x8xf32>
    %2 = tpu.matmul %1, %0, %cst {dimension_numbers = #tpu.dot_dimension_numbers<[1], [1], [0], [0], [0, 0, 1, 0], [], []>} : vector<64x20xf32>, vector<8x20xf32>, vector<64x8xf32> -> vector<64x8xf32>
    %c0_3 = arith.constant 0 : index
    %c0_4 = arith.constant 0 : index
    %3 = vector.load %arg3[%c0_3, %c0_4] : memref<64x1xf32, #tpu.memory_space<vmem>>, vector<64x1xf32>
    %4 = vector.broadcast %3 : vector<64x1xf32> to vector<64x8xf32>
    %5 = arith.addf %2, %4 : vector<64x8xf32>
    %cst_5 = arith.constant 0.000000e+00 : f32
    %6 = vector.broadcast %cst_5 : f32 to vector<64x8xf32>
    %7 = arith.maximumf %5, %6 : vector<64x8xf32>
    %c0_6 = arith.constant 0 : index
    %c0_7 = arith.constant 0 : index
    %8 = vector.load %arg4[%c0_6, %c0_7] : memref<32x64xf32, #tpu.memory_space<vmem>>, vector<32x64xf32>
    %cst_8 = arith.constant dense<0.000000e+00> : vector<32x8xf32>
    %9 = tpu.matmul %8, %7, %cst_8 {dimension_numbers = #tpu.dot_dimension_numbers<[1], [0], [0], [1], [0, 0, 1, 1], [], []>} : vector<32x64xf32>, vector<64x8xf32>, vector<32x8xf32> -> vector<32x8xf32>
    %c0_9 = arith.constant 0 : index
    %c0_10 = arith.constant 0 : index
    %10 = vector.load %arg5[%c0_9, %c0_10] : memref<32x1xf32, #tpu.memory_space<vmem>>, vector<32x1xf32>
    %11 = vector.broadcast %10 : vector<32x1xf32> to vector<32x8xf32>
    %12 = arith.addf %9, %11 : vector<32x8xf32>
    %cst_11 = arith.constant 0.000000e+00 : f32
    %13 = vector.broadcast %cst_11 : f32 to vector<32x8xf32>
    %14 = arith.maximumf %12, %13 : vector<32x8xf32>
    %c0_12 = arith.constant 0 : index
    %c0_13 = arith.constant 0 : index
    %15 = vector.load %arg6[%c0_12, %c0_13] : memref<16x32xf32, #tpu.memory_space<vmem>>, vector<16x32xf32>
    %cst_14 = arith.constant dense<0.000000e+00> : vector<16x8xf32>
    %16 = tpu.matmul %15, %14, %cst_14 {dimension_numbers = #tpu.dot_dimension_numbers<[1], [0], [0], [1], [0, 0, 1, 1], [], []>} : vector<16x32xf32>, vector<32x8xf32>, vector<16x8xf32> -> vector<16x8xf32>
    %c0_15 = arith.constant 0 : index
    %c0_16 = arith.constant 0 : index
    %17 = vector.load %arg7[%c0_15, %c0_16] : memref<16x1xf32, #tpu.memory_space<vmem>>, vector<16x1xf32>
    %18 = vector.broadcast %17 : vector<16x1xf32> to vector<16x8xf32>
    %19 = arith.addf %16, %18 : vector<16x8xf32>
    %20 = tpu.transpose %19, [1, 0] : vector<16x8xf32> -> vector<8x16xf32>
    %c0_17 = arith.constant 0 : index
    %c0_18 = arith.constant 0 : index
    %21 = vector.load %arg8[%c0_17, %c0_18] : memref<8x16xf32, #tpu.memory_space<vmem>>, vector<8x16xf32>
    tpu.vector_store %arg8[%c0_17, %c0_18], %20 {strides = array<i32>} : memref<8x16xf32, #tpu.memory_space<vmem>>, vector<8x16xf32>,
    return
  }
  func.func @transform_0(%arg0: i32) -> (i32, i32) {
    %c0_i32 = arith.constant 0 : i32
    %c0_i32_0 = arith.constant 0 : i32
    return %arg0, %c0_i32 : i32, i32
  }
  func.func @transform_1(%arg0: i32) -> (i32, i32) {
    %c0_i32 = arith.constant 0 : i32
    %c0_i32_0 = arith.constant 0 : i32
    %c0_i32_1 = arith.constant 0 : i32
    return %c0_i32, %c0_i32_0 : i32, i32
  }
  func.func @transform_2(%arg0: i32) -> (i32, i32) {
    %c0_i32 = arith.constant 0 : i32
    %c0_i32_0 = arith.constant 0 : i32
    %c0_i32_1 = arith.constant 0 : i32
    return %c0_i32, %c0_i32_0 : i32, i32
  }
  func.func @transform_3(%arg0: i32) -> (i32, i32) {
    %c0_i32 = arith.constant 0 : i32
    %c0_i32_0 = arith.constant 0 : i32
    %c0_i32_1 = arith.constant 0 : i32
    return %c0_i32, %c0_i32_0 : i32, i32
  }
  func.func @transform_4(%arg0: i32) -> (i32, i32) {
    %c0_i32 = arith.constant 0 : i32
    %c0_i32_0 = arith.constant 0 : i32
    %c0_i32_1 = arith.constant 0 : i32
    return %c0_i32, %c0_i32_0 : i32, i32
  }
  func.func @transform_5(%arg0: i32) -> (i32, i32) {
    %c0_i32 = arith.constant 0 : i32
    %c0_i32_0 = arith.constant 0 : i32
    %c0_i32_1 = arith.constant 0 : i32
    return %c0_i32, %c0_i32_0 : i32, i32
  }
  func.func @transform_6(%arg0: i32) -> (i32, i32) {
    %c0_i32 = arith.constant 0 : i32
    %c0_i32_0 = arith.constant 0 : i32
    %c0_i32_1 = arith.constant 0 : i32
    return %c0_i32, %c0_i32_0 : i32, i32
  }
  func.func @transform_7(%arg0: i32) -> (i32, i32) {
    %c0_i32 = arith.constant 0 : i32
    %c0_i32_0 = arith.constant 0 : i32
    return %arg0, %c0_i32 : i32, i32
  }
}

</mosaic_0001>

<llo_original>
// kernel: tpu_custom_call.1
$region0: #{tpu_custom_call.1}
  #allocation0 [shape = 'u32[]', space=smem, size = 0x4, offset = 0x4, fixed_abs, tag = 'smem constant byte address 0x4 - core index']
  #allocation1 [shape = 'u32[144,128]{1,0:T(1,128)}', space=vmem, size = 0x12000, scoped, tag = 'internal scratch']
  %s0 = inlined_call_operand.vmem [shape: f32[8,20], index: 0, kind: input, shape index: {}]
  %s1 = inlined_call_operand.vmem [shape: f32[64,20], index: 1, kind: input, shape index: {}]
  %s2 = inlined_call_operand.vmem [shape: f32[64,1], index: 2, kind: input, shape index: {}]
  %s3 = inlined_call_operand.vmem [shape: f32[32,64], index: 3, kind: input, shape index: {}]
  %s4 = inlined_call_operand.vmem [shape: f32[32,1], index: 4, kind: input, shape index: {}]
  %s5 = inlined_call_operand.vmem [shape: f32[16,32], index: 5, kind: input, shape index: {}]
  %s6 = inlined_call_operand.vmem [shape: f32[16,1], index: 6, kind: input, shape index: {}]
  %s7 = inlined_call_operand.hbm [shape: f32[8,16], index: 7, kind: output, shape index: {}]
  %s8 = sld [smem:[#allocation0]]
  $region38: #{tpu_custom_call.1} parent=0
    _
  %s10 = ssub.s32 1, %s8
  %s11 = scalar_select 0, %s10, %s8
  $region1: #{tpu_custom_call.1} parent=0
    #allocation2 [shape = 'u8[4096]{0}', space=vmem, size = 0x1000, scoped, tag = 'output window, operand 0, single buffered']
    #allocation3 [shape = 's32[1]{0}', space=sflag, size = 0x4, scoped, tag = 'scoped memory for tpu_custom_call.1']
    %12 = vsyncpa [#allocation3], 0
    // Predicated region
    $region2: #{tpu_custom_call.1} parent=1 // pred_check
      _
    $region3: #{tpu_custom_call.1} parent=1 // pred_check_branch
      %14 = sbr.rel (0) target = $region5
    $region4: #{tpu_custom_call.1} parent=1 // pred_region
      _
    $region5: #{tpu_custom_call.1} parent=1 // pred_fallthru
      _
    // Predicated region
    $region6: #{tpu_custom_call.1} parent=1 // pred_check
      _
    $region7: #{tpu_custom_call.1} parent=1 // pred_check_branch
      %16 = sbr.rel (0) target = $region9
    $region8: #{tpu_custom_call.1} parent=1 // pred_region
      _
    $region9: #{tpu_custom_call.1} parent=1 // pred_fallthru
      _
    // Predicated region
    $region10: #{tpu_custom_call.1} parent=1 // pred_check
      _
    $region11: #{tpu_custom_call.1} parent=1 // pred_check_branch
      %18 = sbr.rel (0) target = $region13
    $region12: #{tpu_custom_call.1} parent=1 // pred_region
      _
    $region13: #{tpu_custom_call.1} parent=1 // pred_fallthru
      _
    // Predicated region
    $region14: #{tpu_custom_call.1} parent=1 // pred_check
      _
    $region15: #{tpu_custom_call.1} parent=1 // pred_check_branch
      %20 = sbr.rel (0) target = $region17
    $region16: #{tpu_custom_call.1} parent=1 // pred_region
      _
    $region17: #{tpu_custom_call.1} parent=1 // pred_fallthru
      _
    // Predicated region
    $region18: #{tpu_custom_call.1} parent=1 // pred_check
      _
    $region19: #{tpu_custom_call.1} parent=1 // pred_check_branch
      %22 = sbr.rel (0) target = $region21
    $region20: #{tpu_custom_call.1} parent=1 // pred_region
      _
    $region21: #{tpu_custom_call.1} parent=1 // pred_fallthru
      _
    // Predicated region
    $region22: #{tpu_custom_call.1} parent=1 // pred_check
      _
    $region23: #{tpu_custom_call.1} parent=1 // pred_check_branch
      %24 = sbr.rel (0) target = $region25
    $region24: #{tpu_custom_call.1} parent=1 // pred_region
      _
    $region25: #{tpu_custom_call.1} parent=1 // pred_fallthru
      _
    // Predicated region
    $region26: #{tpu_custom_call.1} parent=1 // pred_check
      _
    $region27: #{tpu_custom_call.1} parent=1 // pred_check_branch
      %26 = sbr.rel (0) target = $region29
    $region28: #{tpu_custom_call.1} parent=1 // pred_region
      _
    $region29: #{tpu_custom_call.1} parent=1 // pred_fallthru
      _
    %v27 = vld [vmem:[%s0] sm:$0xff]
    %v28 = vld [vmem:[%s1] sm:$0xff]
    %v29 = vld [vmem:[%s1 + $0x8] sm:$0xff]
    %v30 = vld [vmem:[%s1 + $0x10] sm:$0xff]
    %v31 = vld [vmem:[%s1 + $0x18] sm:$0xff]
    %v32 = vld [vmem:[%s1 + $0x20] sm:$0xff]
    %v33 = vld [vmem:[%s1 + $0x28] sm:$0xff]
    %v34 = vld [vmem:[%s1 + $0x30] sm:$0xff]
    %v35 = vld [vmem:[%s1 + $0x38] sm:$0xff]
    %v36 = vld [vmem:[%s2] sm:$0xff]
    %v37 = vld [vmem:[%s2 + $0x8] sm:$0xff]
    %v38 = vld [vmem:[%s2 + $0x10] sm:$0xff]
    %v39 = vld [vmem:[%s2 + $0x18] sm:$0xff]
    %v40 = vld [vmem:[%s2 + $0x20] sm:$0xff]
    %v41 = vld [vmem:[%s2 + $0x28] sm:$0xff]
    %v42 = vld [vmem:[%s2 + $0x30] sm:$0xff]
    %v43 = vld [vmem:[%s2 + $0x38] sm:$0xff]
    %45 = vset.pattern.permute.xlu0 0
    %46 = vperm.xlu0 %45, %v36
    %v47 = vpop.permute.xlu0 %46
    %50 = vset.pattern.permute.xlu0 0
    %51 = vperm.xlu0 %50, %v37
    %v52 = vpop.permute.xlu0 %51
    %55 = vset.pattern.permute.xlu0 0
    %56 = vperm.xlu0 %55, %v38
    %v57 = vpop.permute.xlu0 %56
    %60 = vset.pattern.permute.xlu0 0
    %61 = vperm.xlu0 %60, %v39
    %v62 = vpop.permute.xlu0 %61
    %65 = vset.pattern.permute.xlu0 0
    %66 = vperm.xlu0 %65, %v40
    %v67 = vpop.permute.xlu0 %66
    %70 = vset.pattern.permute.xlu0 0
    %71 = vperm.xlu0 %70, %v41
    %v72 = vpop.permute.xlu0 %71
    %75 = vset.pattern.permute.xlu0 0
    %76 = vperm.xlu0 %75, %v42
    %v77 = vpop.permute.xlu0 %76
    %80 = vset.pattern.permute.xlu0 0
    %81 = vperm.xlu0 %80, %v43
    %v82 = vpop.permute.xlu0 %81
    %vm84 = vcmask 162816
    %v86 = vsel %vm84, %v28, 0
    %v89 = vsel %vm84, %v29, 0
    %v92 = vsel %vm84, %v30, 0
    %v95 = vsel %vm84, %v31, 0
    %v98 = vsel %vm84, %v32, 0
    %v101 = vsel %vm84, %v33, 0
    %v104 = vsel %vm84, %v34, 0
    %v107 = vsel %vm84, %v35, 0
    %v110 = vsel %vm84, %v27, 0
    %112 = vmatprep.subr.mxu0 0.0
    %113 = vmatpush1.xpose.msra.mxu0 %v110
    %114 = vmatprep.subr.mxu0 0.0
    %115 = vmatpush1.xpose.msra.mxu0 0.0
    %116 = vmatprep.subr.mxu0 0.0
    %117 = vmatpush1.xpose.msra.mxu0 0.0
    %118 = vmatprep.subr.mxu0 0.0
    %119 = vmatpush1.xpose.msra.mxu0 0.0
    %120 = vmatprep.subr.mxu0 0.0
    %121 = vmatpush1.xpose.msra.mxu0 0.0
    %122 = vmatprep.subr.mxu0 0.0
    %123 = vmatpush1.xpose.msra.mxu0 0.0
    %124 = vmatprep.subr.mxu0 0.0
    %125 = vmatpush1.xpose.msra.mxu0 0.0
    %126 = vmatprep.subr.mxu0 0.0
    %127 = vmatpush1.xpose.msra.mxu0 0.0
    %128 = vmatprep.subr.mxu0 0.0
    %129 = vmatpush1.xpose.msra.mxu0 0.0
    %130 = vmatprep.subr.mxu0 0.0
    %131 = vmatpush1.xpose.msra.mxu0 0.0
    %132 = vmatprep.subr.mxu0 0.0
    %133 = vmatpush1.xpose.msra.mxu0 0.0
    %134 = vmatprep.subr.mxu0 0.0
    %135 = vmatpush1.xpose.msra.mxu0 0.0
    %136 = vmatprep.subr.mxu0 0.0
    %137 = vmatpush1.xpose.msra.mxu0 0.0
    %138 = vmatprep.subr.mxu0 0.0
    %139 = vmatpush1.xpose.msra.mxu0 0.0
    %140 = vmatprep.subr.mxu0 0.0
    %141 = vmatpush1.xpose.msra.mxu0 0.0
    %142 = vmatprep.subr.mxu0 0.0
    %143 = vmatpush1.xpose.msra.mxu0 0.0
    %144 = vmatprep.subr.mxu0 0.0
    %145 = vmatpush1.xpose.msra.mxu0 0.0
    %146 = vmatprep.subr.mxu0 0.0
    %147 = vmatpush1.xpose.msra.mxu0 0.0
    %148 = vmatprep.subr.mxu0 0.0
    %149 = vmatpush1.xpose.msra.mxu0 0.0
    %150 = vmatprep.subr.mxu0 0.0
    %151 = vmatpush1.xpose.msra.mxu0 0.0
    %152 = vmatprep.subr.mxu0 0.0
    %153 = vmatpush1.xpose.msra.mxu0 0.0
    %154 = vmatprep.subr.mxu0 0.0
    %155 = vmatpush1.xpose.msra.mxu0 0.0
    %156 = vmatprep.subr.mxu0 0.0
    %157 = vmatpush1.xpose.msra.mxu0 0.0
    %158 = vmatprep.subr.mxu0 0.0
    %159 = vmatpush1.xpose.msra.mxu0 0.0
    %160 = vmatprep.subr.mxu0 0.0
    %161 = vmatpush1.xpose.msra.mxu0 0.0
    %162 = vmatprep.subr.mxu0 0.0
    %163 = vmatpush1.xpose.msra.mxu0 0.0
    %164 = vmatprep.subr.mxu0 0.0
    %165 = vmatpush1.xpose.msra.mxu0 0.0
    %166 = vmatprep.subr.mxu0 0.0
    %167 = vmatpush1.xpose.msra.mxu0 0.0
    %168 = vmatprep.subr.mxu0 0.0
    %169 = vmatpush1.xpose.msra.mxu0 0.0
    %170 = vmatprep.subr.mxu0 0.0
    %171 = vmatpush1.xpose.msra.mxu0 0.0
    %172 = vmatprep.subr.mxu0 0.0
    %173 = vmatpush1.xpose.msra.mxu0 0.0
    %174 = vmatprep.subr.mxu0 0.0
    %175 = vmatpush1.xpose.msra.mxu0 0.0
    %176 = vmatprep.mubr.f32.mxu0 0.0
    %177 = vmatmul.mubr.f32.gmra.mrb[0].mxu0 %v86
    %v178 = vpop.f32.mrb[0].mxu0
    %v179 = vadd.f32 %v47, %v178
    %v180 = vpop.f32.mrb[0].mxu0
    %181 = vmatprep.mubr.f32.mxu0 0.0
    %182 = vmatmul.mubr.f32.gmra.mrb[0].mxu0 %v89
    %v183 = vpop.f32.mrb[0].mxu0
    %v184 = vadd.f32 %v52, %v183
    %v185 = vpop.f32.mrb[0].mxu0
    %186 = vmatprep.mubr.f32.mxu0 0.0
    %187 = vmatmul.mubr.f32.gmra.mrb[0].mxu0 %v92
    %v188 = vpop.f32.mrb[0].mxu0
    %v189 = vadd.f32 %v57, %v188
    %v190 = vpop.f32.mrb[0].mxu0
    %191 = vmatprep.mubr.f32.mxu0 0.0
    %192 = vmatmul.mubr.f32.gmra.mrb[0].mxu0 %v95
    %v193 = vpop.f32.mrb[0].mxu0
    %v194 = vadd.f32 %v62, %v193
    %v195 = vpop.f32.mrb[0].mxu0
    %196 = vmatprep.mubr.f32.mxu0 0.0
    %197 = vmatmul.mubr.f32.gmra.mrb[0].mxu0 %v98
    %v198 = vpop.f32.mrb[0].mxu0
    %v199 = vadd.f32 %v67, %v198
    %v200 = vpop.f32.mrb[0].mxu0
    %201 = vmatprep.mubr.f32.mxu0 0.0
    %202 = vmatmul.mubr.f32.gmra.mrb[0].mxu0 %v101
    %v203 = vpop.f32.mrb[0].mxu0
    %v204 = vadd.f32 %v72, %v203
    %v205 = vpop.f32.mrb[0].mxu0
    %206 = vmatprep.mubr.f32.mxu0 0.0
    %207 = vmatmul.mubr.f32.gmra.mrb[0].mxu0 %v104
    %v208 = vpop.f32.mrb[0].mxu0
    %v209 = vadd.f32 %v77, %v208
    %v210 = vpop.f32.mrb[0].mxu0
    %211 = vmatprep.mubr.f32.mxu0 0.0
    %212 = vmatmul.mubr.f32.gmra.mrb[0].mxu0 %v107
    %v213 = vpop.f32.mrb[0].mxu0
    %v214 = vadd.f32 %v82, %v213
    %v215 = vpop.f32.mrb[0].mxu0
    %216 = vdwg.mxu0
    %v217 = vmax.f32 %v179, 0.0
    %v218 = vmax.f32 %v184, 0.0
    %v219 = vmax.f32 %v189, 0.0
    %v220 = vmax.f32 %v194, 0.0
    %v221 = vmax.f32 %v199, 0.0
    %v222 = vmax.f32 %v204, 0.0
    %v223 = vmax.f32 %v209, 0.0
    %v224 = vmax.f32 %v214, 0.0
    %v225 = vld [vmem:[%s3] sm:$0xff]
    %v226 = vld [vmem:[%s3 + $0x8] sm:$0xff]
    %v227 = vld [vmem:[%s3 + $0x10] sm:$0xff]
    %v228 = vld [vmem:[%s3 + $0x18] sm:$0xff]
    %v229 = vld [vmem:[%s4] sm:$0xff]
    %v230 = vld [vmem:[%s4 + $0x8] sm:$0xff]
    %v231 = vld [vmem:[%s4 + $0x10] sm:$0xff]
    %v232 = vld [vmem:[%s4 + $0x18] sm:$0xff]
    %234 = vset.pattern.permute.xlu0 0
    %235 = vperm.xlu0 %234, %v229
    %v236 = vpop.permute.xlu0 %235
    %239 = vset.pattern.permute.xlu0 0
    %240 = vperm.xlu0 %239, %v230
    %v241 = vpop.permute.xlu0 %240
    %244 = vset.pattern.permute.xlu0 0
    %245 = vperm.xlu0 %244, %v231
    %v246 = vpop.permute.xlu0 %245
    %249 = vset.pattern.permute.xlu0 0
    %250 = vperm.xlu0 %249, %v232
    %v251 = vpop.permute.xlu0 %250
    %vm253 = vcmask 523264
    %v255 = vsel %vm253, %v225, 0
    %v258 = vsel %vm253, %v226, 0
    %v261 = vsel %vm253, %v227, 0
    %v264 = vsel %vm253, %v228, 0
    %266 = vmatprep.subr.mxu0 0.0
    %267 = vmatpush1.msra.mxu0 %v217
    %268 = vmatprep.subr.mxu0 0.0
    %269 = vmatpush1.msra.mxu0 %v218
    %270 = vmatprep.subr.mxu0 0.0
    %271 = vmatpush1.msra.mxu0 %v219
    %272 = vmatprep.subr.mxu0 0.0
    %273 = vmatpush1.msra.mxu0 %v220
    %274 = vmatprep.subr.mxu0 0.0
    %275 = vmatpush1.msra.mxu0 %v221
    %276 = vmatprep.subr.mxu0 0.0
    %277 = vmatpush1.msra.mxu0 %v222
    %278 = vmatprep.subr.mxu0 0.0
    %279 = vmatpush1.msra.mxu0 %v223
    %280 = vmatprep.subr.mxu0 0.0
    %281 = vmatpush1.msra.mxu0 %v224
    %282 = vmatprep.subr.mxu0 0.0
    %283 = vmatpush1.msra.mxu0 0.0
    %284 = vmatprep.subr.mxu0 0.0
    %285 = vmatpush1.msra.mxu0 0.0
    %286 = vmatprep.subr.mxu0 0.0
    %287 = vmatpush1.msra.mxu0 0.0
    %288 = vmatprep.subr.mxu0 0.0
    %289 = vmatpush1.msra.mxu0 0.0
    %290 = vmatprep.subr.mxu0 0.0
    %291 = vmatpush1.msra.mxu0 0.0
    %292 = vmatprep.subr.mxu0 0.0
    %293 = vmatpush1.msra.mxu0 0.0
    %294 = vmatprep.subr.mxu0 0.0
    %295 = vmatpush1.msra.mxu0 0.0
    %296 = vmatprep.subr.mxu0 0.0
    %297 = vmatpush1.msra.mxu0 0.0
    %298 = vmatprep.subr.mxu0 0.0
    %299 = vmatpush1.msra.mxu0 0.0
    %300 = vmatprep.subr.mxu0 0.0
    %301 = vmatpush1.msra.mxu0 0.0
    %302 = vmatprep.subr.mxu0 0.0
    %303 = vmatpush1.msra.mxu0 0.0
    %304 = vmatprep.subr.mxu0 0.0
    %305 = vmatpush1.msra.mxu0 0.0
    %306 = vmatprep.subr.mxu0 0.0
    %307 = vmatpush1.msra.mxu0 0.0
    %308 = vmatprep.subr.mxu0 0.0
    %309 = vmatpush1.msra.mxu0 0.0
    %310 = vmatprep.subr.mxu0 0.0
    %311 = vmatpush1.msra.mxu0 0.0
    %312 = vmatprep.subr.mxu0 0.0
    %313 = vmatpush1.msra.mxu0 0.0
    %314 = vmatprep.subr.mxu0 0.0
    %315 = vmatpush1.msra.mxu0 0.0
    %316 = vmatprep.subr.mxu0 0.0
    %317 = vmatpush1.msra.mxu0 0.0
    %318 = vmatprep.subr.mxu0 0.0
    %319 = vmatpush1.msra.mxu0 0.0
    %320 = vmatprep.subr.mxu0 0.0
    %321 = vmatpush1.msra.mxu0 0.0
    %322 = vmatprep.subr.mxu0 0.0
    %323 = vmatpush1.msra.mxu0 0.0
    %324 = vmatprep.subr.mxu0 0.0
    %325 = vmatpush1.msra.mxu0 0.0
    %326 = vmatprep.subr.mxu0 0.0
    %327 = vmatpush1.msra.mxu0 0.0
    %328 = vmatprep.subr.mxu0 0.0
    %329 = vmatpush1.msra.mxu0 0.0
    %330 = vmatprep.mubr.f32.mxu0 0.0
    %331 = vmatmul.mubr.f32.gmra.mrb[0].mxu0 %v255
    %v332 = vpop.f32.mrb[0].mxu0
    %v333 = vadd.f32 %v236, %v332
    %v334 = vpop.f32.mrb[0].mxu0
    %335 = vmatprep.mubr.f32.mxu0 0.0
    %336 = vmatmul.mubr.f32.gmra.mrb[0].mxu0 %v258
    %v337 = vpop.f32.mrb[0].mxu0
    %v338 = vadd.f32 %v241, %v337
    %v339 = vpop.f32.mrb[0].mxu0
    %340 = vmatprep.mubr.f32.mxu0 0.0
    %341 = vmatmul.mubr.f32.gmra.mrb[0].mxu0 %v261
    %v342 = vpop.f32.mrb[0].mxu0
    %v343 = vadd.f32 %v246, %v342
    %v344 = vpop.f32.mrb[0].mxu0
    %345 = vmatprep.mubr.f32.mxu0 0.0
    %346 = vmatmul.mubr.f32.gmra.mrb[0].mxu0 %v264
    %v347 = vpop.f32.mrb[0].mxu0
    %v348 = vadd.f32 %v251, %v347
    %v349 = vpop.f32.mrb[0].mxu0
    %350 = vdwg.mxu0
    %v351 = vmax.f32 %v333, 0.0
    %v352 = vmax.f32 %v338, 0.0
    %v353 = vmax.f32 %v343, 0.0
    %v354 = vmax.f32 %v348, 0.0
    %v355 = vld [vmem:[%s5] sm:$0xff]
    %v356 = vld [vmem:[%s5 + $0x8] sm:$0xff]
    %v357 = vld [vmem:[%s6] sm:$0xff]
    %v358 = vld [vmem:[%s6 + $0x8] sm:$0xff]
    %360 = vset.pattern.permute.xlu0 0
    %361 = vperm.xlu0 %360, %v357
    %v362 = vpop.permute.xlu0 %361
    %365 = vset.pattern.permute.xlu0 0
    %366 = vperm.xlu0 %365, %v358
    %v367 = vpop.permute.xlu0 %366
    %vm369 = vcmask 261120
    %v371 = vsel %vm369, %v355, 0
    %v374 = vsel %vm369, %v356, 0
    %376 = vmatprep.subr.mxu0 0.0
    %377 = vmatpush1.msra.mxu0 %v351
    %378 = vmatprep.subr.mxu0 0.0
    %379 = vmatpush1.msra.mxu0 %v352
    %380 = vmatprep.subr.mxu0 0.0
    %381 = vmatpush1.msra.mxu0 %v353
    %382 = vmatprep.subr.mxu0 0.0
    %383 = vmatpush1.msra.mxu0 %v354
    %384 = vmatprep.subr.mxu0 0.0
    %385 = vmatpush1.msra.mxu0 0.0
    %386 = vmatprep.subr.mxu0 0.0
    %387 = vmatpush1.msra.mxu0 0.0
    %388 = vmatprep.subr.mxu0 0.0
    %389 = vmatpush1.msra.mxu0 0.0
    %390 = vmatprep.subr.mxu0 0.0
    %391 = vmatpush1.msra.mxu0 0.0
    %392 = vmatprep.subr.mxu0 0.0
    %393 = vmatpush1.msra.mxu0 0.0
    %394 = vmatprep.subr.mxu0 0.0
    %395 = vmatpush1.msra.mxu0 0.0
    %396 = vmatprep.subr.mxu0 0.0
    %397 = vmatpush1.msra.mxu0 0.0
    %398 = vmatprep.subr.mxu0 0.0
    %399 = vmatpush1.msra.mxu0 0.0
    %400 = vmatprep.subr.mxu0 0.0
    %401 = vmatpush1.msra.mxu0 0.0
    %402 = vmatprep.subr.mxu0 0.0
    %403 = vmatpush1.msra.mxu0 0.0
    %404 = vmatprep.subr.mxu0 0.0
    %405 = vmatpush1.msra.mxu0 0.0
    %406 = vmatprep.subr.mxu0 0.0
    %407 = vmatpush1.msra.mxu0 0.0
    %408 = vmatprep.subr.mxu0 0.0
    %409 = vmatpush1.msra.mxu0 0.0
    %410 = vmatprep.subr.mxu0 0.0
    %411 = vmatpush1.msra.mxu0 0.0
    %412 = vmatprep.subr.mxu0 0.0
    %413 = vmatpush1.msra.mxu0 0.0
    %414 = vmatprep.subr.mxu0 0.0
    %415 = vmatpush1.msra.mxu0 0.0
    %416 = vmatprep.subr.mxu0 0.0
    %417 = vmatpush1.msra.mxu0 0.0
    %418 = vmatprep.subr.mxu0 0.0
    %419 = vmatpush1.msra.mxu0 0.0
    %420 = vmatprep.subr.mxu0 0.0
    %421 = vmatpush1.msra.mxu0 0.0
    %422 = vmatprep.subr.mxu0 0.0
    %423 = vmatpush1.msra.mxu0 0.0
    %424 = vmatprep.subr.mxu0 0.0
    %425 = vmatpush1.msra.mxu0 0.0
    %426 = vmatprep.subr.mxu0 0.0
    %427 = vmatpush1.msra.mxu0 0.0
    %428 = vmatprep.subr.mxu0 0.0
    %429 = vmatpush1.msra.mxu0 0.0
    %430 = vmatprep.subr.mxu0 0.0
    %431 = vmatpush1.msra.mxu0 0.0
    %432 = vmatprep.subr.mxu0 0.0
    %433 = vmatpush1.msra.mxu0 0.0
    %434 = vmatprep.subr.mxu0 0.0
    %435 = vmatpush1.msra.mxu0 0.0
    %436 = vmatprep.subr.mxu0 0.0
    %437 = vmatpush1.msra.mxu0 0.0
    %438 = vmatprep.subr.mxu0 0.0
    %439 = vmatpush1.msra.mxu0 0.0
    %440 = vmatprep.mubr.f32.mxu0 0.0
    %441 = vmatmul.mubr.f32.gmra.mrb[0].mxu0 %v371
    %v442 = vpop.f32.mrb[0].mxu0
    %v443 = vadd.f32 %v362, %v442
    %v444 = vpop.f32.mrb[0].mxu0
    %445 = vmatprep.mubr.f32.mxu0 0.0
    %446 = vmatmul.mubr.f32.gmra.mrb[0].mxu0 %v374
    %v447 = vpop.f32.mrb[0].mxu0
    %v448 = vadd.f32 %v367, %v447
    %v449 = vpop.f32.mrb[0].mxu0
    %450 = vdwg.mxu0
    %451 = vxpose.xlu0.b32.start [1/16] %v443, 128
    %452 = vxpose.xlu0.b32.cont [2/16] %v448, 128
    %453 = vxpose.xlu0.b32.cont [3/16] 0.0, 128
    %454 = vxpose.xlu0.b32.cont [4/16] 0.0, 128
    %455 = vxpose.xlu0.b32.cont [5/16] 0.0, 128
    %456 = vxpose.xlu0.b32.cont [6/16] 0.0, 128
    %457 = vxpose.xlu0.b32.cont [7/16] 0.0, 128
    %458 = vxpose.xlu0.b32.cont [8/16] 0.0, 128
    %459 = vxpose.xlu0.b32.cont [9/16] 0.0, 128
    %460 = vxpose.xlu0.b32.cont [10/16] 0.0, 128
    %461 = vxpose.xlu0.b32.cont [11/16] 0.0, 128
    %462 = vxpose.xlu0.b32.cont [12/16] 0.0, 128
    %463 = vxpose.xlu0.b32.cont [13/16] 0.0, 128
    %464 = vxpose.xlu0.b32.cont [14/16] 0.0, 128
    %465 = vxpose.xlu0.b32.cont [15/16] 0.0, 128
    %466 = vxpose.xlu0.b32.end [16/16] 0.0, 128
    %v467 = vpop.trf.xlu0
    %v468 = vpop.trf.xlu0
    %v469 = vpop.trf.xlu0
    %v470 = vpop.trf.xlu0
    %v471 = vpop.trf.xlu0
    %v472 = vpop.trf.xlu0
    %v473 = vpop.trf.xlu0
    %v474 = vpop.trf.xlu0
    %v475 = vpop.trf.xlu0
    %v476 = vpop.trf.xlu0
    %v477 = vpop.trf.xlu0
    %v478 = vpop.trf.xlu0
    %v479 = vpop.trf.xlu0
    %v480 = vpop.trf.xlu0
    %v481 = vpop.trf.xlu0
    %v482 = vpop.trf.xlu0
    %vm483 = vcmask 130048
    %484 = vst.msk [vmem:[#allocation2] sm:$0xff] %vm483, %v467
    // Predicated region
    $region30: #{tpu_custom_call.1} parent=1 // pred_check
      _
    $region31: #{tpu_custom_call.1} parent=1 // pred_check_branch
      %486 = sbr.rel (0) target = $region33
    $region32: #{tpu_custom_call.1} parent=1 // pred_region
      %s488 = ssub.s32 128, 128
      %489 = vsyncadd [#allocation3], %s488
      %s491 = sshll.u32 [#allocation2], 4
      %s492 = int_to_ptr.vmem [resolvable:$true] %s491
      %494 = dma.vmem_to_hbm [thread:$0]  %s492, 128, %s7, [#allocation3]
    $region33: #{tpu_custom_call.1} parent=1 // pred_fallthru
      _
    // Predicated region
    $region34: #{tpu_custom_call.1} parent=1 // pred_check
      _
    $region35: #{tpu_custom_call.1} parent=1 // pred_check_branch
      %496 = sbr.rel (0) target = $region37
    $region36: #{tpu_custom_call.1} parent=1 // pred_region
      %497 = dma.done [#allocation3], 128
    $region37: #{tpu_custom_call.1} parent=1 // pred_fallthru
      _
    %498 = vsyncpa [#allocation3], 1

</llo_original>
